<compile_context>
chip_gen: v7x
topology: tpu7x:2x2x1
jax: 0.10.0
libtpu: 0.0.40
codegen_flags: <defaults>
</compile_context>

<pallas_src>
import jax
import jax.numpy as jnp
from jax.experimental import pallas as pl
from jax.experimental.pallas import tpu as pltpu

GN_EPS = 1e-5
OUT_LANES = 128  # lane-dense padded output width


def _round_up(x, m):
    return ((x + m - 1) // m) * m


def pred_head_kernel(x_ref, w1_ref, gamma_ref, beta_ref, w2_ref, b2_ref, o_ref):
    # x_ref:     (TM, D)        tile of roi_feat
    # w1_ref:    (D, D)         first linear weight (pre-transposed, no bias)
    # gamma_ref: (1, D)         GroupNorm scale
    # beta_ref:  (1, D)         GroupNorm shift
    # w2_ref:    (D, OUT_LANES) second linear weight, zero-padded to 128 lanes
    # b2_ref:    (1, OUT_LANES) second linear bias, zero-padded to 128 lanes
    # o_ref:     (TM, OUT_LANES) lane-dense output tile
    x = x_ref[...].astype(jnp.float32)

    # Linear (no bias) on the MXU.
    h = jnp.dot(x, w1_ref[...], preferred_element_type=jnp.float32)  # (TM, D)

    # GroupNorm (single group == per-row LayerNorm over all channels).
    # One pass of independent reductions: sum and sum-of-squares; no `centered`
    # full-tile temporary, no serialized reduce->reduce dependency.
    inv_d = jnp.float32(1.0 / h.shape[-1])
    s1 = jnp.sum(h, axis=-1, keepdims=True)
    s2 = jnp.sum(h * h, axis=-1, keepdims=True)
    mean = s1 * inv_d
    var = jnp.maximum(s2 * inv_d - mean * mean, 0.0)
    h_norm = (h - mean) * jax.lax.rsqrt(var + GN_EPS)
    h_norm = h_norm * gamma_ref[...] + beta_ref[...]

    # ReLU.
    h_act = jnp.maximum(h_norm, 0.0)

    # Final Linear (with bias) into a lane-dense 128-wide output block.
    out = jnp.dot(h_act, w2_ref[...], preferred_element_type=jnp.float32) + b2_ref[...]
    o_ref[...] = out.astype(o_ref.dtype)


def pred_head(roi_feat, w1, gamma, beta, w2, b2, *, tile_m=1024):
    N, D = roi_feat.shape
    out_dim = w2.shape[1]
    assert out_dim <= OUT_LANES

    # Pick a large row tile (mem/overhead-bound kernel), but never exceed the
    # (8-rounded) number of rows; pad N to a multiple of the tile.
    tile_m = max(8, min(tile_m, _round_up(N, 8)))
    n_pad = _round_up(N, tile_m)
    if n_pad != N:
        roi_feat = jnp.pad(roi_feat, ((0, n_pad - N), (0, 0)))

    # Parameter prep: broadcastable 2-D views + zero-pad the tiny output dim to
    # 128 lanes so the kernel's stores are full-lane (no vst.msk / strided HBM
    # writeback).
    gamma2 = gamma.reshape(1, D)
    beta2 = beta.reshape(1, D)
    w2p = jnp.pad(w2, ((0, 0), (0, OUT_LANES - out_dim)))
    b2p = jnp.pad(b2, (0, OUT_LANES - out_dim)).reshape(1, OUT_LANES)

    grid = (n_pad // tile_m,)

    cost = pl.CostEstimate(
        flops=2 * n_pad * D * D + 2 * n_pad * D * OUT_LANES + 10 * n_pad * D,
        transcendentals=n_pad,  # one rsqrt per row
        bytes_accessed=4 * (n_pad * D + D * D + 2 * D + D * OUT_LANES
                            + OUT_LANES + n_pad * OUT_LANES),
    )

    out_padded = pl.pallas_call(
        pred_head_kernel,
        out_shape=jax.ShapeDtypeStruct((n_pad, OUT_LANES), roi_feat.dtype),
        grid_spec=pltpu.PrefetchScalarGridSpec(
            num_scalar_prefetch=0,
            grid=grid,
            in_specs=[
                pl.BlockSpec((tile_m, D), lambda i: (i, 0)),        # roi_feat tile
                pl.BlockSpec((D, D), lambda i: (0, 0)),             # W1 (resident)
                pl.BlockSpec((1, D), lambda i: (0, 0)),             # gamma
                pl.BlockSpec((1, D), lambda i: (0, 0)),             # beta
                pl.BlockSpec((D, OUT_LANES), lambda i: (0, 0)),     # W2 (padded)
                pl.BlockSpec((1, OUT_LANES), lambda i: (0, 0)),     # b2 (padded)
            ],
            out_specs=pl.BlockSpec((tile_m, OUT_LANES), lambda i: (i, 0)),
        ),
        compiler_params=pltpu.CompilerParams(
            dimension_semantics=("parallel",)),
        cost_estimate=cost,
    )(roi_feat, w1, gamma2, beta2, w2p, b2p)

    # Drop row padding and the lane padding of the output dimension.
    return out_padded[:N, :out_dim]


def pred_head_reference(roi_feat, w1, gamma, beta, w2, b2):
    h = roi_feat.astype(jnp.float32) @ w1
    mean = jnp.mean(h, axis=-1, keepdims=True)
    var = jnp.mean((h - mean) ** 2, axis=-1, keepdims=True)
    h = (h - mean) / jnp.sqrt(var + GN_EPS)
    h = h * gamma[None, :] + beta[None, :]
    h = jnp.maximum(h, 0.0)
    return h @ w2 + b2[None, :]


if __name__ == "__main__":
    # Small synthetic config: num_mods is unused in forward; n_actor = hidden dim.
    N = 16          # number of ROI features (rows); not a multiple of tile_m -> padded
    n_actor = 32    # hidden size
    out_dim = 5

    key = jax.random.PRNGKey(0)
    k_x, k_w1, k_g, k_b, k_w2, k_b2 = jax.random.split(key, 6)

    roi_feat = jax.random.normal(k_x, (N, n_actor), dtype=jnp.float32)

    # Deterministic synthetic parameters (shapes match the PyTorch module).
    w1 = jax.random.normal(k_w1, (n_actor, n_actor), dtype=jnp.float32) * 0.1   # Linear(n_actor, n_actor, bias=False), pre-transposed [in, out]
    gamma = 1.0 + 0.05 * jax.random.normal(k_g, (n_actor,), dtype=jnp.float32)  # GroupNorm weight
    beta = 0.05 * jax.random.normal(k_b, (n_actor,), dtype=jnp.float32)         # GroupNorm bias
    w2 = jax.random.normal(k_w2, (n_actor, out_dim), dtype=jnp.float32) * 0.1   # nn.Linear(n_actor, 5), pre-transposed [in, out]
    b2 = 0.05 * jax.random.normal(k_b2, (out_dim,), dtype=jnp.float32)

    out = pred_head(roi_feat, w1, gamma, beta, w2, b2)
    out = jax.block_until_ready(out)

    ref = pred_head_reference(roi_feat, w1, gamma, beta, w2, b2)
    assert out.shape == (N, out_dim)
    assert jnp.allclose(out, ref, atol=1e-4, rtol=1e-4)

    print("KERNEL_OK")
</pallas_src>

<mosaic_0001>
module attributes {stable_mosaic.version = 11 : i64} {
  func.func @pred_head_kernel(%arg0: i32, %arg1: memref<16x32xf32, #tpu.memory_space<vmem>>, %arg2: memref<32x32xf32, #tpu.memory_space<vmem>>, %arg3: memref<1x32xf32, #tpu.memory_space<vmem>>, %arg4: memref<1x32xf32, #tpu.memory_space<vmem>>, %arg5: memref<32x128xf32, #tpu.memory_space<vmem>>, %arg6: memref<1x128xf32, #tpu.memory_space<vmem>>, %arg7: memref<16x128xf32, #tpu.memory_space<vmem>>) attributes {dimension_semantics = [#tpu.dimension_semantics<parallel>], iteration_bounds = array<i64: 1>, scalar_prefetch = 0 : i64, scratch_operands = 0 : i64, tpu.core_type = #tpu.core_type<tc>, window_params = [{transform_indices = @transform_0, window_bounds = array<i64: 16, 32>}, {pipeline_mode = #tpu.pipeline_mode<synchronous>, transform_indices = @transform_1, window_bounds = array<i64: 32, 32>}, {pipeline_mode = #tpu.pipeline_mode<synchronous>, transform_indices = @transform_2, window_bounds = array<i64: 1, 32>}, {pipeline_mode = #tpu.pipeline_mode<synchronous>, transform_indices = @transform_3, window_bounds = array<i64: 1, 32>}, {pipeline_mode = #tpu.pipeline_mode<synchronous>, transform_indices = @transform_4, window_bounds = array<i64: 32, 128>}, {pipeline_mode = #tpu.pipeline_mode<synchronous>, transform_indices = @transform_5, window_bounds = array<i64: 1, 128>}, {transform_indices = @transform_6, window_bounds = array<i64: 16, 128>}]} {
    %c0 = arith.constant 0 : index
    %c0_0 = arith.constant 0 : index
    %0 = vector.load %arg1[%c0, %c0_0] : memref<16x32xf32, #tpu.memory_space<vmem>>, vector<16x32xf32>
    %c0_1 = arith.constant 0 : index
    %c0_2 = arith.constant 0 : index
    %1 = vector.load %arg2[%c0_1, %c0_2] : memref<32x32xf32, #tpu.memory_space<vmem>>, vector<32x32xf32>
    %cst = arith.constant dense<0.000000e+00> : vector<16x32xf32>
    %2 = tpu.matmul %0, %1, %cst {dimension_numbers = #tpu.dot_dimension_numbers<[1], [0], [0], [1], [0, 0, 1, 1], [], []>} : vector<16x32xf32>, vector<32x32xf32>, vector<16x32xf32> -> vector<16x32xf32>
    %cst_3 = arith.constant dense<0.000000e+00> : vector<16xf32>
    %3 = vector.multi_reduction <add>, %2, %cst_3 [1] : vector<16x32xf32> to vector<16xf32>
    %4 = vector.shape_cast %3 : vector<16xf32> to vector<16x1xf32>
    %5 = arith.mulf %2, %2 : vector<16x32xf32>
    %cst_4 = arith.constant dense<0.000000e+00> : vector<16xf32>
    %6 = vector.multi_reduction <add>, %5, %cst_4 [1] : vector<16x32xf32> to vector<16xf32>
    %7 = vector.shape_cast %6 : vector<16xf32> to vector<16x1xf32>
    %cst_5 = arith.constant 3.125000e-02 : f32
    %8 = vector.broadcast %cst_5 : f32 to vector<16x1xf32>
    %9 = arith.mulf %4, %8 : vector<16x1xf32>
    %cst_6 = arith.constant 3.125000e-02 : f32
    %10 = vector.broadcast %cst_6 : f32 to vector<16x1xf32>
    %11 = arith.mulf %7, %10 : vector<16x1xf32>
    %12 = arith.mulf %9, %9 : vector<16x1xf32>
    %13 = arith.subf %11, %12 : vector<16x1xf32>
    %cst_7 = arith.constant 0.000000e+00 : f32
    %14 = vector.broadcast %cst_7 : f32 to vector<16x1xf32>
    %15 = arith.maximumf %13, %14 : vector<16x1xf32>
    %16 = vector.broadcast %9 : vector<16x1xf32> to vector<16x32xf32>
    %17 = arith.subf %2, %16 : vector<16x32xf32>
    %cst_8 = arith.constant 9.99999974E-6 : f32
    %18 = vector.broadcast %cst_8 : f32 to vector<16x1xf32>
    %19 = arith.addf %15, %18 : vector<16x1xf32>
    %20 = math.rsqrt %19 : vector<16x1xf32>
    %21 = vector.broadcast %20 : vector<16x1xf32> to vector<16x32xf32>
    %22 = arith.mulf %17, %21 : vector<16x32xf32>
    %c0_9 = arith.constant 0 : index
    %c0_10 = arith.constant 0 : index
    %23 = vector.load %arg3[%c0_9, %c0_10] : memref<1x32xf32, #tpu.memory_space<vmem>>, vector<1x32xf32>
    %24 = vector.broadcast %23 : vector<1x32xf32> to vector<16x32xf32>
    %25 = arith.mulf %22, %24 : vector<16x32xf32>
    %c0_11 = arith.constant 0 : index
    %c0_12 = arith.constant 0 : index
    %26 = vector.load %arg4[%c0_11, %c0_12] : memref<1x32xf32, #tpu.memory_space<vmem>>, vector<1x32xf32>
    %27 = vector.broadcast %26 : vector<1x32xf32> to vector<16x32xf32>
    %28 = arith.addf %25, %27 : vector<16x32xf32>
    %cst_13 = arith.constant 0.000000e+00 : f32
    %29 = vector.broadcast %cst_13 : f32 to vector<16x32xf32>
    %30 = arith.maximumf %28, %29 : vector<16x32xf32>
    %c0_14 = arith.constant 0 : index
    %c0_15 = arith.constant 0 : index
    %31 = vector.load %arg5[%c0_14, %c0_15] : memref<32x128xf32, #tpu.memory_space<vmem>>, vector<32x128xf32>
    %cst_16 = arith.constant dense<0.000000e+00> : vector<16x128xf32>
    %32 = tpu.matmul %30, %31, %cst_16 {dimension_numbers = #tpu.dot_dimension_numbers<[1], [0], [0], [1], [0, 0, 1, 1], [], []>} : vector<16x32xf32>, vector<32x128xf32>, vector<16x128xf32> -> vector<16x128xf32>
    %c0_17 = arith.constant 0 : index
    %c0_18 = arith.constant 0 : index
    %33 = vector.load %arg6[%c0_17, %c0_18] : memref<1x128xf32, #tpu.memory_space<vmem>>, vector<1x128xf32>
    %34 = vector.broadcast %33 : vector<1x128xf32> to vector<16x128xf32>
    %35 = arith.addf %32, %34 : vector<16x128xf32>
    %c0_19 = arith.constant 0 : index
    %c0_20 = arith.constant 0 : index
    %36 = vector.load %arg7[%c0_19, %c0_20] : memref<16x128xf32, #tpu.memory_space<vmem>>, vector<16x128xf32>
    tpu.vector_store %arg7[%c0_19, %c0_20], %35 {strides = array<i32>} : memref<16x128xf32, #tpu.memory_space<vmem>>, vector<16x128xf32>,
    return
  }
  func.func @transform_0(%arg0: i32) -> (i32, i32) {
    %c0_i32 = arith.constant 0 : i32
    %c0_i32_0 = arith.constant 0 : i32
    return %arg0, %c0_i32 : i32, i32
  }
  func.func @transform_1(%arg0: i32) -> (i32, i32) {
    %c0_i32 = arith.constant 0 : i32
    %c0_i32_0 = arith.constant 0 : i32
    %c0_i32_1 = arith.constant 0 : i32
    return %c0_i32, %c0_i32_0 : i32, i32
  }
  func.func @transform_2(%arg0: i32) -> (i32, i32) {
    %c0_i32 = arith.constant 0 : i32
    %c0_i32_0 = arith.constant 0 : i32
    %c0_i32_1 = arith.constant 0 : i32
    return %c0_i32, %c0_i32_0 : i32, i32
  }
  func.func @transform_3(%arg0: i32) -> (i32, i32) {
    %c0_i32 = arith.constant 0 : i32
    %c0_i32_0 = arith.constant 0 : i32
    %c0_i32_1 = arith.constant 0 : i32
    return %c0_i32, %c0_i32_0 : i32, i32
  }
  func.func @transform_4(%arg0: i32) -> (i32, i32) {
    %c0_i32 = arith.constant 0 : i32
    %c0_i32_0 = arith.constant 0 : i32
    %c0_i32_1 = arith.constant 0 : i32
    return %c0_i32, %c0_i32_0 : i32, i32
  }
  func.func @transform_5(%arg0: i32) -> (i32, i32) {
    %c0_i32 = arith.constant 0 : i32
    %c0_i32_0 = arith.constant 0 : i32
    %c0_i32_1 = arith.constant 0 : i32
    return %c0_i32, %c0_i32_0 : i32, i32
  }
  func.func @transform_6(%arg0: i32) -> (i32, i32) {
    %c0_i32 = arith.constant 0 : i32
    %c0_i32_0 = arith.constant 0 : i32
    return %arg0, %c0_i32 : i32, i32
  }
}

</mosaic_0001>

<llo_original>
// kernel: tpu_custom_call.1
$region0: #{tpu_custom_call.1}
  #allocation0 [shape = 'u32[]', space=smem, size = 0x4, offset = 0x4, fixed_abs, tag = 'smem constant byte address 0x4 - core index']
  #allocation1 [shape = 'u32[144,128]{1,0:T(1,128)}', space=vmem, size = 0x12000, scoped, tag = 'internal scratch']
  %s0 = inlined_call_operand.hbm [shape: f32[16,32], index: 0, kind: input, shape index: {}]
  %s1 = inlined_call_operand.hbm [shape: f32[32,32], index: 1, kind: input, shape index: {}]
  %s2 = inlined_call_operand.vmem [shape: f32[1,32], index: 2, kind: input, shape index: {}]
  %s3 = inlined_call_operand.vmem [shape: f32[1,32], index: 3, kind: input, shape index: {}]
  %s4 = inlined_call_operand.hbm [shape: f32[32,128], index: 4, kind: input, shape index: {}]
  %s5 = inlined_call_operand.vmem [shape: f32[1,128], index: 5, kind: input, shape index: {}]
  %s6 = inlined_call_operand.hbm [shape: f32[16,128], index: 6, kind: output, shape index: {}]
  %s7 = sld [smem:[#allocation0]]
  $region46: #{tpu_custom_call.1} parent=0
    _
  %s9 = ssub.s32 1, %s7
  %s10 = scalar_select 0, %s9, %s7
  $region1: #{tpu_custom_call.1} parent=0
    #allocation2 [shape = 'u8[8192]{0}', space=vmem, size = 0x2000, scoped, tag = 'input window, operand 0, single buffered']
    #allocation3 [shape = 's32[1]{0}', space=sflag, size = 0x4, scoped, tag = 'scoped memory for tpu_custom_call.1']
    #allocation4 [shape = 's32[1]{0}', space=sflag, size = 0x4, scoped, tag = 'scoped memory for tpu_custom_call.1']
    #allocation5 [shape = 'u8[16384]{0}', space=vmem, size = 0x4000, scoped, tag = 'input window, operand 1, single buffered']
    #allocation6 [shape = 's32[1]{0}', space=sflag, size = 0x4, scoped, tag = 'scoped memory for tpu_custom_call.1']
    #allocation7 [shape = 'u8[16384]{0}', space=vmem, size = 0x4000, scoped, tag = 'input window, operand 4, single buffered']
    #allocation8 [shape = 'u8[8192]{0}', space=vmem, size = 0x2000, scoped, tag = 'output window, operand 0, single buffered']
    %11 = vsyncpa [#allocation3], 0
    %12 = vsyncpa [#allocation6], 0
    %13 = vsyncpa [#allocation4], 0
    // Predicated region
    $region2: #{tpu_custom_call.1} parent=1 // pred_check
      _
    $region3: #{tpu_custom_call.1} parent=1 // pred_check_branch
      %15 = sbr.rel (0) target = $region5
    $region4: #{tpu_custom_call.1} parent=1 // pred_region
      %s17 = ssub.s32 256, 256
      %18 = vsyncadd [#allocation3], %s17
      %s19 = sshll.u32 [#allocation2], 4
      %s20 = int_to_ptr.vmem [resolvable:$true] %s19
      %25 = dma.hbm_to_vmem [thread:$0]  %s0, 256, %s20, [#allocation3], 128, 128, 8
    $region5: #{tpu_custom_call.1} parent=1 // pred_fallthru
      _
    // Predicated region
    $region6: #{tpu_custom_call.1} parent=1 // pred_check
      _
    $region7: #{tpu_custom_call.1} parent=1 // pred_check_branch
      %27 = sbr.rel (0) target = $region9
    $region8: #{tpu_custom_call.1} parent=1 // pred_region
      %s29 = ssub.s32 512, 512
      %30 = vsyncadd [#allocation6], %s29
      %s31 = sshll.u32 [#allocation5], 4
      %s32 = int_to_ptr.vmem [resolvable:$true] %s31
      %37 = dma.hbm_to_vmem [thread:$0]  %s1, 512, %s32, [#allocation6], 128, 128, 8
    $region9: #{tpu_custom_call.1} parent=1 // pred_fallthru
      _
    // Predicated region
    $region10: #{tpu_custom_call.1} parent=1 // pred_check
      _
    $region11: #{tpu_custom_call.1} parent=1 // pred_check_branch
      %39 = sbr.rel (0) target = $region13
    $region12: #{tpu_custom_call.1} parent=1 // pred_region
      _
    $region13: #{tpu_custom_call.1} parent=1 // pred_fallthru
      _
    // Predicated region
    $region14: #{tpu_custom_call.1} parent=1 // pred_check
      _
    $region15: #{tpu_custom_call.1} parent=1 // pred_check_branch
      %41 = sbr.rel (0) target = $region17
    $region16: #{tpu_custom_call.1} parent=1 // pred_region
      _
    $region17: #{tpu_custom_call.1} parent=1 // pred_fallthru
      _
    // Predicated region
    $region18: #{tpu_custom_call.1} parent=1 // pred_check
      _
    $region19: #{tpu_custom_call.1} parent=1 // pred_check_branch
      %43 = sbr.rel (0) target = $region21
    $region20: #{tpu_custom_call.1} parent=1 // pred_region
      %s45 = ssub.s32 512, 512
      %46 = vsyncadd [#allocation6], %s45
      %s47 = sshll.u32 [#allocation7], 4
      %s48 = int_to_ptr.vmem [resolvable:$true] %s47
      %53 = dma.hbm_to_vmem [thread:$0]  %s4, 512, %s48, [#allocation6], 128, 128, 8
    $region21: #{tpu_custom_call.1} parent=1 // pred_fallthru
      _
    // Predicated region
    $region22: #{tpu_custom_call.1} parent=1 // pred_check
      _
    $region23: #{tpu_custom_call.1} parent=1 // pred_check_branch
      %55 = sbr.rel (0) target = $region25
    $region24: #{tpu_custom_call.1} parent=1 // pred_region
      _
    $region25: #{tpu_custom_call.1} parent=1 // pred_fallthru
      _
    // Predicated region
    $region26: #{tpu_custom_call.1} parent=1 // pred_check
      _
    $region27: #{tpu_custom_call.1} parent=1 // pred_check_branch
      %57 = sbr.rel (0) target = $region29
    $region28: #{tpu_custom_call.1} parent=1 // pred_region
      %58 = dma.done [#allocation3], 256
    $region29: #{tpu_custom_call.1} parent=1 // pred_fallthru
      _
    // Predicated region
    $region30: #{tpu_custom_call.1} parent=1 // pred_check
      _
    $region31: #{tpu_custom_call.1} parent=1 // pred_check_branch
      %60 = sbr.rel (0) target = $region33
    $region32: #{tpu_custom_call.1} parent=1 // pred_region
      %61 = dma.done [#allocation6], 512
    $region33: #{tpu_custom_call.1} parent=1 // pred_fallthru
      _
    // Predicated region
    $region34: #{tpu_custom_call.1} parent=1 // pred_check
      _
    $region35: #{tpu_custom_call.1} parent=1 // pred_check_branch
      %63 = sbr.rel (0) target = $region37
    $region36: #{tpu_custom_call.1} parent=1 // pred_region
      %64 = dma.done [#allocation6], 512
    $region37: #{tpu_custom_call.1} parent=1 // pred_fallthru
      _
    %v65 = vld [vmem:[#allocation2] sm:$0xff]
    %v66 = vld [vmem:[#allocation2 + $0x8] sm:$0xff]
    %v67 = vld [vmem:[#allocation5] sm:$0xff]
    %v68 = vld [vmem:[#allocation5 + $0x8] sm:$0xff]
    %v69 = vld [vmem:[#allocation5 + $0x10] sm:$0xff]
    %v70 = vld [vmem:[#allocation5 + $0x18] sm:$0xff]
    %vm71 = vcmask 261120
    %v73 = vsel %vm71, %v65, 0
    %v76 = vsel %vm71, %v66, 0
    %78 = vmatprep.subr.mxu0 0.0
    %79 = vmatpush1.msra.mxu0 %v67
    %80 = vmatprep.subr.mxu0 0.0
    %81 = vmatpush1.msra.mxu0 %v68
    %82 = vmatprep.subr.mxu0 0.0
    %83 = vmatpush1.msra.mxu0 %v69
    %84 = vmatprep.subr.mxu0 0.0
    %85 = vmatpush1.msra.mxu0 %v70
    %86 = vmatprep.subr.mxu0 0.0
    %87 = vmatpush1.msra.mxu0 0.0
    %88 = vmatprep.subr.mxu0 0.0
    %89 = vmatpush1.msra.mxu0 0.0
    %90 = vmatprep.subr.mxu0 0.0
    %91 = vmatpush1.msra.mxu0 0.0
    %92 = vmatprep.subr.mxu0 0.0
    %93 = vmatpush1.msra.mxu0 0.0
    %94 = vmatprep.subr.mxu0 0.0
    %95 = vmatpush1.msra.mxu0 0.0
    %96 = vmatprep.subr.mxu0 0.0
    %97 = vmatpush1.msra.mxu0 0.0
    %98 = vmatprep.subr.mxu0 0.0
    %99 = vmatpush1.msra.mxu0 0.0
    %100 = vmatprep.subr.mxu0 0.0
    %101 = vmatpush1.msra.mxu0 0.0
    %102 = vmatprep.subr.mxu0 0.0
    %103 = vmatpush1.msra.mxu0 0.0
    %104 = vmatprep.subr.mxu0 0.0
    %105 = vmatpush1.msra.mxu0 0.0
    %106 = vmatprep.subr.mxu0 0.0
    %107 = vmatpush1.msra.mxu0 0.0
    %108 = vmatprep.subr.mxu0 0.0
    %109 = vmatpush1.msra.mxu0 0.0
    %110 = vmatprep.subr.mxu0 0.0
    %111 = vmatpush1.msra.mxu0 0.0
    %112 = vmatprep.subr.mxu0 0.0
    %113 = vmatpush1.msra.mxu0 0.0
    %114 = vmatprep.subr.mxu0 0.0
    %115 = vmatpush1.msra.mxu0 0.0
    %116 = vmatprep.subr.mxu0 0.0
    %117 = vmatpush1.msra.mxu0 0.0
    %118 = vmatprep.subr.mxu0 0.0
    %119 = vmatpush1.msra.mxu0 0.0
    %120 = vmatprep.subr.mxu0 0.0
    %121 = vmatpush1.msra.mxu0 0.0
    %122 = vmatprep.subr.mxu0 0.0
    %123 = vmatpush1.msra.mxu0 0.0
    %124 = vmatprep.subr.mxu0 0.0
    %125 = vmatpush1.msra.mxu0 0.0
    %126 = vmatprep.subr.mxu0 0.0
    %127 = vmatpush1.msra.mxu0 0.0
    %128 = vmatprep.subr.mxu0 0.0
    %129 = vmatpush1.msra.mxu0 0.0
    %130 = vmatprep.subr.mxu0 0.0
    %131 = vmatpush1.msra.mxu0 0.0
    %132 = vmatprep.subr.mxu0 0.0
    %133 = vmatpush1.msra.mxu0 0.0
    %134 = vmatprep.subr.mxu0 0.0
    %135 = vmatpush1.msra.mxu0 0.0
    %136 = vmatprep.subr.mxu0 0.0
    %137 = vmatpush1.msra.mxu0 0.0
    %138 = vmatprep.subr.mxu0 0.0
    %139 = vmatpush1.msra.mxu0 0.0
    %140 = vmatprep.subr.mxu0 0.0
    %141 = vmatpush1.msra.mxu0 0.0
    %142 = vmatprep.mubr.f32.mxu0 0.0
    %143 = vmatmul.mubr.f32.gmra.mrb[0].mxu0 %v73
    %v144 = vpop.f32.mrb[0].mxu0
    %v145 = vadd.f32 0.0, %v144
    %v146 = vpop.f32.mrb[0].mxu0
    %147 = vmatprep.mubr.f32.mxu0 0.0
    %148 = vmatmul.mubr.f32.gmra.mrb[0].mxu0 %v76
    %v149 = vpop.f32.mrb[0].mxu0
    %v150 = vadd.f32 0.0, %v149
    %v151 = vpop.f32.mrb[0].mxu0
    %152 = vdwg.mxu0
    %v153 = vsel %vm71, %v145, 0.0
    %154 = vadd.xlane.f32.xlu0 %v153
    %v155 = vpop.xlane.xlu0 %154
    %v156 = vsel %vm71, %v150, 0.0
    %157 = vadd.xlane.f32.xlu0 %v156
    %v158 = vpop.xlane.xlu0 %157
    %v159 = vmul.f32 %v145, %v145
    %v160 = vmul.f32 %v150, %v150
    %v161 = vsel %vm71, %v159, 0.0
    %162 = vadd.xlane.f32.xlu0 %v161
    %v163 = vpop.xlane.xlu0 %162
    %v164 = vsel %vm71, %v160, 0.0
    %165 = vadd.xlane.f32.xlu0 %v164
    %v166 = vpop.xlane.xlu0 %165
    %v167 = vmul.f32 %v155, 0.03125
    %v168 = vmul.f32 %v158, 0.03125
    %v169 = vmul.f32 %v163, 0.03125
    %v170 = vmul.f32 %v166, 0.03125
    %v171 = vmul.f32 %v167, %v167
    %v172 = vmul.f32 %v168, %v168
    %v173 = vsub.f32 %v169, %v171
    %v174 = vsub.f32 %v170, %v172
    %v175 = vmax.f32 %v173, 0.0
    %v176 = vmax.f32 %v174, 0.0
    %v177 = vsub.f32 %v145, %v167
    %v178 = vsub.f32 %v150, %v168
    %v179 = vadd.f32 %v175, 1e-05
    %v180 = vadd.f32 %v176, 1e-05
    %v181 = vrsqrt.pop %v179
    %v182 = vrsqrt.pop %v180
    %v183 = vmul.f32 %v177, %v181
    %v184 = vmul.f32 %v178, %v182
    %v185 = vld [vmem:[%s2] sm:$0x1]
    %v187 = vlaneseq
    %v188 = vshrl.u32 %v187, 7
    %v189 = vsub.s32 0, %v188
    %v190 = vrot.slane %v185, %v189
    %v192 = vmul.f32 %v183, %v190
    %v193 = vmul.f32 %v184, %v190
    %v194 = vld [vmem:[%s3] sm:$0x1]
    %v196 = vlaneseq
    %v197 = vshrl.u32 %v196, 7
    %v198 = vsub.s32 0, %v197
    %v199 = vrot.slane %v194, %v198
    %v201 = vadd.f32 %v192, %v199
    %v202 = vadd.f32 %v193, %v199
    %v203 = vmax.f32 %v201, 0.0
    %v204 = vmax.f32 %v202, 0.0
    %v205 = vld [vmem:[#allocation7] sm:$0xff]
    %v206 = vld [vmem:[#allocation7 + $0x8] sm:$0xff]
    %v207 = vld [vmem:[#allocation7 + $0x10] sm:$0xff]
    %v208 = vld [vmem:[#allocation7 + $0x18] sm:$0xff]
    %v209 = vld [vmem:[%s5] sm:$0x1]
    %v211 = vlaneseq
    %v212 = vshrl.u32 %v211, 7
    %v213 = vsub.s32 0, %v212
    %v214 = vrot.slane %v209, %v213
    %v217 = vsel %vm71, %v203, 0
    %v220 = vsel %vm71, %v204, 0
    %222 = vmatprep.subr.mxu0 0.0
    %223 = vmatpush1.msra.mxu0 %v205
    %224 = vmatprep.subr.mxu0 0.0
    %225 = vmatpush1.msra.mxu0 %v206
    %226 = vmatprep.subr.mxu0 0.0
    %227 = vmatpush1.msra.mxu0 %v207
    %228 = vmatprep.subr.mxu0 0.0
    %229 = vmatpush1.msra.mxu0 %v208
    %230 = vmatprep.subr.mxu0 0.0
    %231 = vmatpush1.msra.mxu0 0.0
    %232 = vmatprep.subr.mxu0 0.0
    %233 = vmatpush1.msra.mxu0 0.0
    %234 = vmatprep.subr.mxu0 0.0
    %235 = vmatpush1.msra.mxu0 0.0
    %236 = vmatprep.subr.mxu0 0.0
    %237 = vmatpush1.msra.mxu0 0.0
    %238 = vmatprep.subr.mxu0 0.0
    %239 = vmatpush1.msra.mxu0 0.0
    %240 = vmatprep.subr.mxu0 0.0
    %241 = vmatpush1.msra.mxu0 0.0
    %242 = vmatprep.subr.mxu0 0.0
    %243 = vmatpush1.msra.mxu0 0.0
    %244 = vmatprep.subr.mxu0 0.0
    %245 = vmatpush1.msra.mxu0 0.0
    %246 = vmatprep.subr.mxu0 0.0
    %247 = vmatpush1.msra.mxu0 0.0
    %248 = vmatprep.subr.mxu0 0.0
    %249 = vmatpush1.msra.mxu0 0.0
    %250 = vmatprep.subr.mxu0 0.0
    %251 = vmatpush1.msra.mxu0 0.0
    %252 = vmatprep.subr.mxu0 0.0
    %253 = vmatpush1.msra.mxu0 0.0
    %254 = vmatprep.subr.mxu0 0.0
    %255 = vmatpush1.msra.mxu0 0.0
    %256 = vmatprep.subr.mxu0 0.0
    %257 = vmatpush1.msra.mxu0 0.0
    %258 = vmatprep.subr.mxu0 0.0
    %259 = vmatpush1.msra.mxu0 0.0
    %260 = vmatprep.subr.mxu0 0.0
    %261 = vmatpush1.msra.mxu0 0.0
    %262 = vmatprep.subr.mxu0 0.0
    %263 = vmatpush1.msra.mxu0 0.0
    %264 = vmatprep.subr.mxu0 0.0
    %265 = vmatpush1.msra.mxu0 0.0
    %266 = vmatprep.subr.mxu0 0.0
    %267 = vmatpush1.msra.mxu0 0.0
    %268 = vmatprep.subr.mxu0 0.0
    %269 = vmatpush1.msra.mxu0 0.0
    %270 = vmatprep.subr.mxu0 0.0
    %271 = vmatpush1.msra.mxu0 0.0
    %272 = vmatprep.subr.mxu0 0.0
    %273 = vmatpush1.msra.mxu0 0.0
    %274 = vmatprep.subr.mxu0 0.0
    %275 = vmatpush1.msra.mxu0 0.0
    %276 = vmatprep.subr.mxu0 0.0
    %277 = vmatpush1.msra.mxu0 0.0
    %278 = vmatprep.subr.mxu0 0.0
    %279 = vmatpush1.msra.mxu0 0.0
    %280 = vmatprep.subr.mxu0 0.0
    %281 = vmatpush1.msra.mxu0 0.0
    %282 = vmatprep.subr.mxu0 0.0
    %283 = vmatpush1.msra.mxu0 0.0
    %284 = vmatprep.subr.mxu0 0.0
    %285 = vmatpush1.msra.mxu0 0.0
    %286 = vmatprep.mubr.f32.mxu0 0.0
    %287 = vmatmul.mubr.f32.gmra.mrb[0].mxu0 %v217
    %v288 = vpop.f32.mrb[0].mxu0
    %v289 = vadd.f32 %v214, %v288
    %v290 = vpop.f32.mrb[0].mxu0
    %291 = vmatprep.mubr.f32.mxu0 0.0
    %292 = vmatmul.mubr.f32.gmra.mrb[0].mxu0 %v220
    %v293 = vpop.f32.mrb[0].mxu0
    %v294 = vadd.f32 %v214, %v293
    %v295 = vpop.f32.mrb[0].mxu0
    %296 = vdwg.mxu0
    %297 = vst [vmem:[#allocation8] sm:$0xff] %v289
    %298 = vst [vmem:[#allocation8 + $0x8] sm:$0xff] %v294
    // Predicated region
    $region38: #{tpu_custom_call.1} parent=1 // pred_check
      _
    $region39: #{tpu_custom_call.1} parent=1 // pred_check_branch
      %300 = sbr.rel (0) target = $region41
    $region40: #{tpu_custom_call.1} parent=1 // pred_region
      %s302 = ssub.s32 256, 256
      %303 = vsyncadd [#allocation4], %s302
      %s304 = sshll.u32 [#allocation8], 4
      %s305 = int_to_ptr.vmem [resolvable:$true] %s304
      %310 = dma.vmem_to_hbm [thread:$0]  %s305, 256, %s6, [#allocation4], 128, 128, 8
    $region41: #{tpu_custom_call.1} parent=1 // pred_fallthru
      _
    // Predicated region
    $region42: #{tpu_custom_call.1} parent=1 // pred_check
      _
    $region43: #{tpu_custom_call.1} parent=1 // pred_check_branch
      %312 = sbr.rel (0) target = $region45
    $region44: #{tpu_custom_call.1} parent=1 // pred_region
      %313 = dma.done [#allocation4], 256
    $region45: #{tpu_custom_call.1} parent=1 // pred_fallthru
      _
    %314 = vsyncpa [#allocation3], 1
    %315 = vsyncpa [#allocation6], 1
    %316 = vsyncpa [#allocation4], 1

</llo_original>
